<compile_context>
chip_gen: v7x
topology: tpu7x:2x2x1
jax: 0.10.0
libtpu: 0.0.40
codegen_flags: <defaults>
</compile_context>

<pallas_src>
import functools
import jax
import jax.numpy as jnp
from jax import lax
from jax.experimental import pallas as pl
from jax.experimental.pallas import tpu as pltpu

FEATURE_DIM = 32
NUM_GRADES = 5
H1 = 512          # grade_predictor hidden 1
H2 = 256          # grade_predictor hidden 2 == ordinal_encoder hidden
BN_EPS = 1e-5
OUT_PAD = 128     # lane-dense fused output width (logits | thresholds | zero pad)
MAX_TB = 512      # batch tile: amortizes per-grid-step overhead, fills the MXU
SPLIT_B = 128     # above this batch, force >= 2 grid steps (v7x megacore)


def _round_up(n, m):
    return ((n + m - 1) // m) * m


def _gelu_exact(v):
    # PyTorch nn.GELU() default: exact erf-based GELU (f32 on the VPU).
    return 0.5 * v * (1.0 + lax.erf(v * 0.7071067811865475))


# ---------------------------------------------------------------------------
# Kernel: one batch tile per grid step; all weights VMEM-resident (bf16).
# ---------------------------------------------------------------------------
def head_kernel(x_ref, w14_ref, b14_ref, w2_ref, b2_ref,
                wh_ref, wo_ref, bo_ref, out_ref):
    xb = x_ref[...].astype(jnp.bfloat16)

    # Fused first layer: [TB,32] @ [32, 768] ; cols [0,512)=grade L1 (BN folded),
    # cols [512,768)=ordinal L1. bf16 MXU, f32 accumulate.
    y = (jnp.dot(xb, w14_ref[...], preferred_element_type=jnp.float32)
         + b14_ref[...])

    # Ordinal branch first: reduce it to a [TB, OUT_PAD] partial so only a small
    # value stays live across the grade branch.
    o = _gelu_exact(y[:, H1:])
    ord_part = jnp.dot(o.astype(jnp.bfloat16), wo_ref[...],
                       preferred_element_type=jnp.float32)

    # Grade branch (Dropout(0.6) is identity in eval mode; BN folded into w2/b2).
    h = _gelu_exact(y[:, :H1])
    h = (jnp.dot(h.astype(jnp.bfloat16), w2_ref[...],
                 preferred_element_type=jnp.float32) + b2_ref[...])
    h = _gelu_exact(h)

    # Fused lane-dense final projection: cols [0,5)=logits, [5,9)=thresholds.
    out = (jnp.dot(h.astype(jnp.bfloat16), wh_ref[...],
                   preferred_element_type=jnp.float32)
           + ord_part + bo_ref[...])
    out_ref[...] = out.astype(out_ref.dtype)


# ---------------------------------------------------------------------------
# Parameter construction (shapes match the PyTorch module).
# ---------------------------------------------------------------------------
def init_params(key, feature_dim=FEATURE_DIM, num_grades=NUM_GRADES):
    ks = jax.random.split(key, 10)

    def lin(kw, kb, fan_in, fan_out):
        s = 1.0 / jnp.sqrt(jnp.float32(fan_in))
        w = jax.random.uniform(kw, (fan_in, fan_out), jnp.float32, -s, s)
        b = jax.random.uniform(kb, (1, fan_out), jnp.float32, -s, s)
        return w, b

    w1, b1 = lin(ks[0], ks[1], feature_dim, H1)
    w2, b2 = lin(ks[2], ks[3], H1, H2)
    w3, b3 = lin(ks[4], ks[5], H2, num_grades)
    w4, b4 = lin(ks[6], ks[7], feature_dim, H2)
    w5, b5 = lin(ks[8], ks[9], H2, num_grades - 1)

    # BatchNorm1d default init: gamma=1, beta=0, running_mean=0, running_var=1.
    g1 = jnp.ones((1, H1), jnp.float32); be1 = jnp.zeros((1, H1), jnp.float32)
    m1 = jnp.zeros((1, H1), jnp.float32); v1 = jnp.ones((1, H1), jnp.float32)
    g2 = jnp.ones((1, H2), jnp.float32); be2 = jnp.zeros((1, H2), jnp.float32)
    m2 = jnp.zeros((1, H2), jnp.float32); v2 = jnp.ones((1, H2), jnp.float32)

    return (w1, b1, g1, be1, m1, v1,
            w2, b2, g2, be2, m2, v2,
            w3, b3,
            w4, b4,
            w5, b5)


def _fold_params(params, num_grades):
    """Fold eval-mode BN into Linears, fuse L1 weights and final projections.

    Weights are emitted in bfloat16 (MXU-native); biases stay f32 (added to the
    f32 accumulator).
    """
    (w1, b1, g1, be1, m1, v1,
     w2, b2, g2, be2, m2, v2,
     w3, b3, w4, b4, w5, b5) = params

    s1 = g1 * lax.rsqrt(v1 + BN_EPS)            # [1, H1]
    w1f = w1 * s1                               # [F, H1]
    b1f = (b1 - m1) * s1 + be1                  # [1, H1]
    s2 = g2 * lax.rsqrt(v2 + BN_EPS)            # [1, H2]
    w2f = w2 * s2                               # [H1, H2]
    b2f = (b2 - m2) * s2 + be2                  # [1, H2]

    # Fuse both branches' first layers.
    w14 = jnp.concatenate([w1f, w4], axis=1)    # [F, H1 + H2]
    b14 = jnp.concatenate([b1f, b4], axis=1)    # [1, H1 + H2]

    # Lane-dense fused final projection (zero-padded to 128 lanes).
    ng = num_grades
    wh = jnp.zeros((H2, OUT_PAD), jnp.float32).at[:, :ng].set(w3)
    wo = jnp.zeros((H2, OUT_PAD), jnp.float32).at[:, ng:2 * ng - 1].set(w5)
    bo = (jnp.zeros((1, OUT_PAD), jnp.float32)
          .at[:, :ng].set(b3)
          .at[:, ng:2 * ng - 1].set(b5))

    bf = jnp.bfloat16
    return (w14.astype(bf), b14, w2f.astype(bf), b2f,
            wh.astype(bf), wo.astype(bf), bo)


# ---------------------------------------------------------------------------
# Wrapper
# ---------------------------------------------------------------------------
@functools.partial(jax.jit, static_argnames=("num_grades",))
def enhanced_grade_consistency_head(x, params, num_grades=NUM_GRADES):
    B, F = x.shape
    w14, b14, w2f, b2f, wh, wo, bo = _fold_params(params, num_grades)

    # Batch tile: large enough to amortize per-step overhead / fill the MXU,
    # small (multiple of 8) for tiny B. For B > SPLIT_B, cap at ceil(B/2) so the
    # grid has >= 2 steps and v7x can shard them across its two TensorCores.
    tb = min(MAX_TB, _round_up(B, 8))
    if B > SPLIT_B:
        tb = min(tb, _round_up((B + 1) // 2, 8))
    grid = (pl.cdiv(B, tb),)   # partial last block masked by Pallas (no pad copy)

    def resident(arr):  # weights/biases: same block every grid step -> loaded once
        return pl.BlockSpec(arr.shape, lambda i: (0, 0))

    out = pl.pallas_call(
        head_kernel,
        out_shape=jax.ShapeDtypeStruct((B, OUT_PAD), jnp.float32),
        grid=grid,
        in_specs=[
            pl.BlockSpec((tb, F), lambda i: (i, 0)),
            resident(w14), resident(b14),
            resident(w2f), resident(b2f),
            resident(wh), resident(wo), resident(bo),
        ],
        out_specs=pl.BlockSpec((tb, OUT_PAD), lambda i: (i, 0)),
        compiler_params=pltpu.CompilerParams(
            dimension_semantics=("parallel",),
            vmem_limit_bytes=32 * 1024 * 1024),
    )(x, w14, b14, w2f, b2f, wh, wo, bo)

    logits = out[:, :num_grades]
    thresholds = out[:, num_grades:2 * num_grades - 1]
    return logits, thresholds


# ---------------------------------------------------------------------------
# Pure-JAX reference (unfused f32, matches the PyTorch module in eval mode).
# ---------------------------------------------------------------------------
def reference(x, params):
    (w1, b1, g1, be1, m1, v1,
     w2, b2, g2, be2, m2, v2,
     w3, b3, w4, b4, w5, b5) = params

    def gelu(v):
        return 0.5 * v * (1.0 + lax.erf(v * 0.7071067811865475))

    h = x @ w1 + b1
    h = (h - m1) / jnp.sqrt(v1 + BN_EPS) * g1 + be1
    h = gelu(h)
    h = h @ w2 + b2
    h = (h - m2) / jnp.sqrt(v2 + BN_EPS) * g2 + be2
    h = gelu(h)
    logits = h @ w3 + b3
    o = gelu(x @ w4 + b4)
    thr = o @ w5 + b5
    return logits, thr


if __name__ == "__main__":
    key = jax.random.PRNGKey(0)
    kx, kp = jax.random.split(key)

    B = 8
    x = jax.random.normal(kx, (B, FEATURE_DIM), jnp.float32)
    params = init_params(kp)

    logits, thresholds = enhanced_grade_consistency_head(x, params)
    jax.block_until_ready((logits, thresholds))

    ref_logits, ref_thr = reference(x, params)
    assert logits.shape == (B, NUM_GRADES)
    assert thresholds.shape == (B, NUM_GRADES - 1)
    # bf16 weights/activations with f32 accumulation: relax tolerance vs f32 ref.
    assert jnp.allclose(logits, ref_logits, atol=5e-2, rtol=5e-2)
    assert jnp.allclose(thresholds, ref_thr, atol=5e-2, rtol=5e-2)

    print("KERNEL_OK")
</pallas_src>

<mosaic_0001>
module attributes {stable_mosaic.version = 11 : i64} {
  func.func @head_kernel(%arg0: i32, %arg1: memref<8x32xf32, #tpu.memory_space<vmem>>, %arg2: memref<32x768xbf16, #tpu.memory_space<vmem>>, %arg3: memref<1x768xf32, #tpu.memory_space<vmem>>, %arg4: memref<512x256xbf16, #tpu.memory_space<vmem>>, %arg5: memref<1x256xf32, #tpu.memory_space<vmem>>, %arg6: memref<256x128xbf16, #tpu.memory_space<vmem>>, %arg7: memref<256x128xbf16, #tpu.memory_space<vmem>>, %arg8: memref<1x128xf32, #tpu.memory_space<vmem>>, %arg9: memref<8x128xf32, #tpu.memory_space<vmem>>) attributes {dimension_semantics = [#tpu.dimension_semantics<parallel>], iteration_bounds = array<i64: 1>, scalar_prefetch = 0 : i64, scratch_operands = 0 : i64, tpu.core_type = #tpu.core_type<tc>, window_params = [{transform_indices = @transform_0, window_bounds = array<i64: 8, 32>}, {pipeline_mode = #tpu.pipeline_mode<synchronous>, transform_indices = @transform_1, window_bounds = array<i64: 32, 768>}, {pipeline_mode = #tpu.pipeline_mode<synchronous>, transform_indices = @transform_2, window_bounds = array<i64: 1, 768>}, {pipeline_mode = #tpu.pipeline_mode<synchronous>, transform_indices = @transform_3, window_bounds = array<i64: 512, 256>}, {pipeline_mode = #tpu.pipeline_mode<synchronous>, transform_indices = @transform_4, window_bounds = array<i64: 1, 256>}, {pipeline_mode = #tpu.pipeline_mode<synchronous>, transform_indices = @transform_5, window_bounds = array<i64: 256, 128>}, {pipeline_mode = #tpu.pipeline_mode<synchronous>, transform_indices = @transform_6, window_bounds = array<i64: 256, 128>}, {pipeline_mode = #tpu.pipeline_mode<synchronous>, transform_indices = @transform_7, window_bounds = array<i64: 1, 128>}, {transform_indices = @transform_8, window_bounds = array<i64: 8, 128>}]} {
    %c0 = arith.constant 0 : index
    %c0_0 = arith.constant 0 : index
    %0 = vector.load %arg1[%c0, %c0_0] : memref<8x32xf32, #tpu.memory_space<vmem>>, vector<8x32xf32>
    %1 = arith.truncf %0 : vector<8x32xf32> to vector<8x32xbf16>
    %c0_1 = arith.constant 0 : index
    %c0_2 = arith.constant 0 : index
    %2 = vector.load %arg2[%c0_1, %c0_2] : memref<32x768xbf16, #tpu.memory_space<vmem>>, vector<32x768xbf16>
    %cst = arith.constant dense<0.000000e+00> : vector<8x768xf32>
    %3 = tpu.matmul %1, %2, %cst {dimension_numbers = #tpu.dot_dimension_numbers<[1], [0], [0], [1], [0, 0, 1, 1], [], []>} : vector<8x32xbf16>, vector<32x768xbf16>, vector<8x768xf32> -> vector<8x768xf32>
    %c0_3 = arith.constant 0 : index
    %c0_4 = arith.constant 0 : index
    %4 = vector.load %arg3[%c0_3, %c0_4] : memref<1x768xf32, #tpu.memory_space<vmem>>, vector<1x768xf32>
    %5 = vector.broadcast %4 : vector<1x768xf32> to vector<8x768xf32>
    %6 = arith.addf %3, %5 : vector<8x768xf32>
    %7 = vector.extract_strided_slice %6 {offsets = [0, 512], sizes = [8, 256], strides = [1, 1]} : vector<8x768xf32> to vector<8x256xf32>
    %cst_5 = arith.constant 5.000000e-01 : f32
    %8 = vector.broadcast %cst_5 : f32 to vector<8x256xf32>
    %9 = arith.mulf %8, %7 : vector<8x256xf32>
    %cst_6 = arith.constant 0.707106769 : f32
    %10 = vector.broadcast %cst_6 : f32 to vector<8x256xf32>
    %11 = arith.mulf %7, %10 : vector<8x256xf32>
    %12 = math.erf %11 : vector<8x256xf32>
    %cst_7 = arith.constant 1.000000e+00 : f32
    %13 = vector.broadcast %cst_7 : f32 to vector<8x256xf32>
    %14 = arith.addf %13, %12 : vector<8x256xf32>
    %15 = arith.mulf %9, %14 : vector<8x256xf32>
    %16 = arith.truncf %15 : vector<8x256xf32> to vector<8x256xbf16>
    %c0_8 = arith.constant 0 : index
    %c0_9 = arith.constant 0 : index
    %17 = vector.load %arg7[%c0_8, %c0_9] : memref<256x128xbf16, #tpu.memory_space<vmem>>, vector<256x128xbf16>
    %cst_10 = arith.constant dense<0.000000e+00> : vector<8x128xf32>
    %18 = tpu.matmul %16, %17, %cst_10 {dimension_numbers = #tpu.dot_dimension_numbers<[1], [0], [0], [1], [0, 0, 1, 1], [], []>} : vector<8x256xbf16>, vector<256x128xbf16>, vector<8x128xf32> -> vector<8x128xf32>
    %19 = vector.extract_strided_slice %6 {offsets = [0, 0], sizes = [8, 512], strides = [1, 1]} : vector<8x768xf32> to vector<8x512xf32>
    %cst_11 = arith.constant 5.000000e-01 : f32
    %20 = vector.broadcast %cst_11 : f32 to vector<8x512xf32>
    %21 = arith.mulf %20, %19 : vector<8x512xf32>
    %cst_12 = arith.constant 0.707106769 : f32
    %22 = vector.broadcast %cst_12 : f32 to vector<8x512xf32>
    %23 = arith.mulf %19, %22 : vector<8x512xf32>
    %24 = math.erf %23 : vector<8x512xf32>
    %cst_13 = arith.constant 1.000000e+00 : f32
    %25 = vector.broadcast %cst_13 : f32 to vector<8x512xf32>
    %26 = arith.addf %25, %24 : vector<8x512xf32>
    %27 = arith.mulf %21, %26 : vector<8x512xf32>
    %28 = arith.truncf %27 : vector<8x512xf32> to vector<8x512xbf16>
    %c0_14 = arith.constant 0 : index
    %c0_15 = arith.constant 0 : index
    %29 = vector.load %arg4[%c0_14, %c0_15] : memref<512x256xbf16, #tpu.memory_space<vmem>>, vector<512x256xbf16>
    %cst_16 = arith.constant dense<0.000000e+00> : vector<8x256xf32>
    %30 = tpu.matmul %28, %29, %cst_16 {dimension_numbers = #tpu.dot_dimension_numbers<[1], [0], [0], [1], [0, 0, 1, 1], [], []>} : vector<8x512xbf16>, vector<512x256xbf16>, vector<8x256xf32> -> vector<8x256xf32>
    %c0_17 = arith.constant 0 : index
    %c0_18 = arith.constant 0 : index
    %31 = vector.load %arg5[%c0_17, %c0_18] : memref<1x256xf32, #tpu.memory_space<vmem>>, vector<1x256xf32>
    %32 = vector.broadcast %31 : vector<1x256xf32> to vector<8x256xf32>
    %33 = arith.addf %30, %32 : vector<8x256xf32>
    %cst_19 = arith.constant 5.000000e-01 : f32
    %34 = vector.broadcast %cst_19 : f32 to vector<8x256xf32>
    %35 = arith.mulf %34, %33 : vector<8x256xf32>
    %cst_20 = arith.constant 0.707106769 : f32
    %36 = vector.broadcast %cst_20 : f32 to vector<8x256xf32>
    %37 = arith.mulf %33, %36 : vector<8x256xf32>
    %38 = math.erf %37 : vector<8x256xf32>
    %cst_21 = arith.constant 1.000000e+00 : f32
    %39 = vector.broadcast %cst_21 : f32 to vector<8x256xf32>
    %40 = arith.addf %39, %38 : vector<8x256xf32>
    %41 = arith.mulf %35, %40 : vector<8x256xf32>
    %42 = arith.truncf %41 : vector<8x256xf32> to vector<8x256xbf16>
    %c0_22 = arith.constant 0 : index
    %c0_23 = arith.constant 0 : index
    %43 = vector.load %arg6[%c0_22, %c0_23] : memref<256x128xbf16, #tpu.memory_space<vmem>>, vector<256x128xbf16>
    %cst_24 = arith.constant dense<0.000000e+00> : vector<8x128xf32>
    %44 = tpu.matmul %42, %43, %cst_24 {dimension_numbers = #tpu.dot_dimension_numbers<[1], [0], [0], [1], [0, 0, 1, 1], [], []>} : vector<8x256xbf16>, vector<256x128xbf16>, vector<8x128xf32> -> vector<8x128xf32>
    %45 = arith.addf %44, %18 : vector<8x128xf32>
    %c0_25 = arith.constant 0 : index
    %c0_26 = arith.constant 0 : index
    %46 = vector.load %arg8[%c0_25, %c0_26] : memref<1x128xf32, #tpu.memory_space<vmem>>, vector<1x128xf32>
    %47 = vector.broadcast %46 : vector<1x128xf32> to vector<8x128xf32>
    %48 = arith.addf %45, %47 : vector<8x128xf32>
    %c0_27 = arith.constant 0 : index
    %c0_28 = arith.constant 0 : index
    %49 = vector.load %arg9[%c0_27, %c0_28] : memref<8x128xf32, #tpu.memory_space<vmem>>, vector<8x128xf32>
    tpu.vector_store %arg9[%c0_27, %c0_28], %48 {strides = array<i32>} : memref<8x128xf32, #tpu.memory_space<vmem>>, vector<8x128xf32>,
    return
  }
  func.func @transform_0(%arg0: i32) -> (i32, i32) {
    %c0_i32 = arith.constant 0 : i32
    %c0_i32_0 = arith.constant 0 : i32
    return %arg0, %c0_i32 : i32, i32
  }
  func.func @transform_1(%arg0: i32) -> (i32, i32) {
    %c0_i32 = arith.constant 0 : i32
    %c0_i32_0 = arith.constant 0 : i32
    %c0_i32_1 = arith.constant 0 : i32
    return %c0_i32, %c0_i32_0 : i32, i32
  }
  func.func @transform_2(%arg0: i32) -> (i32, i32) {
    %c0_i32 = arith.constant 0 : i32
    %c0_i32_0 = arith.constant 0 : i32
    %c0_i32_1 = arith.constant 0 : i32
    return %c0_i32, %c0_i32_0 : i32, i32
  }
  func.func @transform_3(%arg0: i32) -> (i32, i32) {
    %c0_i32 = arith.constant 0 : i32
    %c0_i32_0 = arith.constant 0 : i32
    %c0_i32_1 = arith.constant 0 : i32
    return %c0_i32, %c0_i32_0 : i32, i32
  }
  func.func @transform_4(%arg0: i32) -> (i32, i32) {
    %c0_i32 = arith.constant 0 : i32
    %c0_i32_0 = arith.constant 0 : i32
    %c0_i32_1 = arith.constant 0 : i32
    return %c0_i32, %c0_i32_0 : i32, i32
  }
  func.func @transform_5(%arg0: i32) -> (i32, i32) {
    %c0_i32 = arith.constant 0 : i32
    %c0_i32_0 = arith.constant 0 : i32
    %c0_i32_1 = arith.constant 0 : i32
    return %c0_i32, %c0_i32_0 : i32, i32
  }
  func.func @transform_6(%arg0: i32) -> (i32, i32) {
    %c0_i32 = arith.constant 0 : i32
    %c0_i32_0 = arith.constant 0 : i32
    %c0_i32_1 = arith.constant 0 : i32
    return %c0_i32, %c0_i32_0 : i32, i32
  }
  func.func @transform_7(%arg0: i32) -> (i32, i32) {
    %c0_i32 = arith.constant 0 : i32
    %c0_i32_0 = arith.constant 0 : i32
    %c0_i32_1 = arith.constant 0 : i32
    return %c0_i32, %c0_i32_0 : i32, i32
  }
  func.func @transform_8(%arg0: i32) -> (i32, i32) {
    %c0_i32 = arith.constant 0 : i32
    %c0_i32_0 = arith.constant 0 : i32
    return %arg0, %c0_i32 : i32, i32
  }
}

</mosaic_0001>

<llo_original>
// kernel: enhanced_grade_consistency_head.1
$region0: #{enhanced_grade_consistency_head.1}
  #allocation0 [shape = 'u32[]', space=smem, size = 0x4, offset = 0x4, fixed_abs, tag = 'smem constant byte address 0x4 - core index']
  #allocation1 [shape = 'u32[144,128]{1,0:T(1,128)}', space=vmem, size = 0x12000, scoped, tag = 'internal scratch']
  %s0 = inlined_call_operand.vmem [shape: f32[8,32], index: 0, kind: input, shape index: {}]
  %s1 = inlined_call_operand.vmem [shape: bf16[32,768], index: 1, kind: input, shape index: {}]
  %s2 = inlined_call_operand.vmem [shape: f32[1,768], index: 2, kind: input, shape index: {}]
  %s3 = inlined_call_operand.vmem [shape: bf16[512,256], index: 3, kind: input, shape index: {}]
  %s4 = inlined_call_operand.vmem [shape: f32[1,256], index: 4, kind: input, shape index: {}]
  %s5 = inlined_call_operand.vmem [shape: bf16[256,128], index: 5, kind: input, shape index: {}]
  %s6 = inlined_call_operand.vmem [shape: bf16[256,128], index: 6, kind: input, shape index: {}]
  %s7 = inlined_call_operand.vmem [shape: f32[1,128], index: 7, kind: input, shape index: {}]
  %s8 = inlined_call_operand.vmem [shape: f32[8,128], index: 8, kind: output, shape index: {}]
  %s9 = sld [smem:[#allocation0]]
  $region42: #{enhanced_grade_consistency_head.1} parent=0
    _
  %s11 = ssub.s32 1, %s9
  %s12 = scalar_select 0, %s11, %s9
  // Predicated region
  $region2: #{enhanced_grade_consistency_head.1} parent=0 // pred_check
    _
  $region3: #{enhanced_grade_consistency_head.1} parent=0 // pred_check_branch
    %14 = sbr.rel (0) target = $region5
  $region4: #{enhanced_grade_consistency_head.1} parent=0 // pred_region
    _
  $region5: #{enhanced_grade_consistency_head.1} parent=0 // pred_fallthru
    _
  // Predicated region
  $region6: #{enhanced_grade_consistency_head.1} parent=0 // pred_check
    _
  $region7: #{enhanced_grade_consistency_head.1} parent=0 // pred_check_branch
    %16 = sbr.rel (0) target = $region9
  $region8: #{enhanced_grade_consistency_head.1} parent=0 // pred_region
    _
  $region9: #{enhanced_grade_consistency_head.1} parent=0 // pred_fallthru
    _
  // Predicated region
  $region10: #{enhanced_grade_consistency_head.1} parent=0 // pred_check
    _
  $region11: #{enhanced_grade_consistency_head.1} parent=0 // pred_check_branch
    %18 = sbr.rel (0) target = $region13
  $region12: #{enhanced_grade_consistency_head.1} parent=0 // pred_region
    _
  $region13: #{enhanced_grade_consistency_head.1} parent=0 // pred_fallthru
    _
  // Predicated region
  $region14: #{enhanced_grade_consistency_head.1} parent=0 // pred_check
    _
  $region15: #{enhanced_grade_consistency_head.1} parent=0 // pred_check_branch
    %20 = sbr.rel (0) target = $region17
  $region16: #{enhanced_grade_consistency_head.1} parent=0 // pred_region
    _
  $region17: #{enhanced_grade_consistency_head.1} parent=0 // pred_fallthru
    _
  // Predicated region
  $region18: #{enhanced_grade_consistency_head.1} parent=0 // pred_check
    _
  $region19: #{enhanced_grade_consistency_head.1} parent=0 // pred_check_branch
    %22 = sbr.rel (0) target = $region21
  $region20: #{enhanced_grade_consistency_head.1} parent=0 // pred_region
    _
  $region21: #{enhanced_grade_consistency_head.1} parent=0 // pred_fallthru
    _
  // Predicated region
  $region22: #{enhanced_grade_consistency_head.1} parent=0 // pred_check
    _
  $region23: #{enhanced_grade_consistency_head.1} parent=0 // pred_check_branch
    %24 = sbr.rel (0) target = $region25
  $region24: #{enhanced_grade_consistency_head.1} parent=0 // pred_region
    _
  $region25: #{enhanced_grade_consistency_head.1} parent=0 // pred_fallthru
    _
  // Predicated region
  $region26: #{enhanced_grade_consistency_head.1} parent=0 // pred_check
    _
  $region27: #{enhanced_grade_consistency_head.1} parent=0 // pred_check_branch
    %26 = sbr.rel (0) target = $region29
  $region28: #{enhanced_grade_consistency_head.1} parent=0 // pred_region
    _
  $region29: #{enhanced_grade_consistency_head.1} parent=0 // pred_fallthru
    _
  // Predicated region
  $region30: #{enhanced_grade_consistency_head.1} parent=0 // pred_check
    _
  $region31: #{enhanced_grade_consistency_head.1} parent=0 // pred_check_branch
    %28 = sbr.rel (0) target = $region33
  $region32: #{enhanced_grade_consistency_head.1} parent=0 // pred_region
    _
  $region33: #{enhanced_grade_consistency_head.1} parent=0 // pred_fallthru
    _
  %v30 = vld [vmem:[%s0] sm:$0xff]
  %v31 = vpack.c.bf16 %v30, %v30
  %v32 = vld [vmem:[%s1] sm:$0xff]
  %v33 = vld [vmem:[%s1 + $0x8] sm:$0xff]
  %v34 = vld [vmem:[%s1 + $0x10] sm:$0xff]
  %v35 = vld [vmem:[%s1 + $0x18] sm:$0xff]
  %v36 = vld [vmem:[%s1 + $0x20] sm:$0xff]
  %v37 = vld [vmem:[%s1 + $0x28] sm:$0xff]
  %v38 = vld [vmem:[%s1 + $0x30] sm:$0xff]
  %v39 = vld [vmem:[%s1 + $0x38] sm:$0xff]
  %v40 = vld [vmem:[%s1 + $0x40] sm:$0xff]
  %v41 = vld [vmem:[%s1 + $0x48] sm:$0xff]
  %v42 = vld [vmem:[%s1 + $0x50] sm:$0xff]
  %v43 = vld [vmem:[%s1 + $0x58] sm:$0xff]
  %v44 = vld [vmem:[%s2] sm:$0x3f]
  %v46 = vlaneseq
  %v47 = vshrl.u32 %v46, 7
  %v48 = vsub.s32 0, %v47
  %v49 = vrot.slane %v44, %v48
  %v50 = vlaneseq
  %v51 = vshrl.u32 %v50, 7
  %v52 = vsub.s32 1, %v51
  %v53 = vrot.slane %v44, %v52
  %v54 = vlaneseq
  %v55 = vshrl.u32 %v54, 7
  %v56 = vsub.s32 2, %v55
  %v57 = vrot.slane %v44, %v56
  %v58 = vlaneseq
  %v59 = vshrl.u32 %v58, 7
  %v60 = vsub.s32 3, %v59
  %v61 = vrot.slane %v44, %v60
  %v62 = vlaneseq
  %v63 = vshrl.u32 %v62, 7
  %v64 = vsub.s32 4, %v63
  %v65 = vrot.slane %v44, %v64
  %v66 = vlaneseq
  %v67 = vshrl.u32 %v66, 7
  %v68 = vsub.s32 5, %v67
  %v69 = vrot.slane %v44, %v68
  %v88 = vunpack.c.l.b16 %v32
  %v89 = vunpack.c.h.b16 %v32
  %v90 = vunpack.c.l.b16 %v33
  %v91 = vunpack.c.h.b16 %v33
  %v92 = vunpack.c.l.b16 %v34
  %v93 = vunpack.c.h.b16 %v34
  %v94 = vunpack.c.l.b16 %v35
  %v95 = vunpack.c.h.b16 %v35
  %v96 = vunpack.c.l.b16 %v36
  %v97 = vunpack.c.h.b16 %v36
  %v98 = vunpack.c.l.b16 %v37
  %v99 = vunpack.c.h.b16 %v37
  %v100 = vunpack.c.l.b16 %v38
  %v101 = vunpack.c.h.b16 %v38
  %v102 = vunpack.c.l.b16 %v39
  %v103 = vunpack.c.h.b16 %v39
  %v104 = vunpack.c.l.b16 %v40
  %v105 = vunpack.c.h.b16 %v40
  %v106 = vunpack.c.l.b16 %v41
  %v107 = vunpack.c.h.b16 %v41
  %v108 = vunpack.c.l.b16 %v42
  %v109 = vunpack.c.h.b16 %v42
  %v110 = vunpack.c.l.b16 %v43
  %v111 = vunpack.c.h.b16 %v43
  %v112 = vpack.c.b16 %v94, %v88
  %v113 = vpack.c.b16 %v95, %v89
  %v114 = vpack.c.b16 %v96, %v90
  %v115 = vpack.c.b16 %v97, %v91
  %v116 = vpack.c.b16 %v98, %v92
  %v117 = vpack.c.b16 %v99, %v93
  %v118 = vpack.c.b16 %v106, %v100
  %v119 = vpack.c.b16 %v107, %v101
  %v120 = vpack.c.b16 %v108, %v102
  %v121 = vpack.c.b16 %v109, %v103
  %v122 = vpack.c.b16 %v110, %v104
  %v123 = vpack.c.b16 %v111, %v105
  %vm136 = vcmask 261120
  %v138 = vsel %vm136, %v31, 0
  %140 = vmatprep.subr.bf16.mxu0 %v113
  %141 = vmatpush1.bf16.msra.mxu0 %v112
  %142 = vmatprep.subr.bf16.mxu0 %v119
  %143 = vmatpush1.bf16.msra.mxu0 %v118
  %144 = vmatprep.subr.bf16.mxu0 0
  %145 = vmatpush1.bf16.msra.mxu0 0
  %146 = vmatprep.subr.bf16.mxu0 0
  %147 = vmatpush1.bf16.msra.mxu0 0
  %148 = vmatprep.subr.bf16.mxu0 0
  %149 = vmatpush1.bf16.msra.mxu0 0
  %150 = vmatprep.subr.bf16.mxu0 0
  %151 = vmatpush1.bf16.msra.mxu0 0
  %152 = vmatprep.subr.bf16.mxu0 0
  %153 = vmatpush1.bf16.msra.mxu0 0
  %154 = vmatprep.subr.bf16.mxu0 0
  %155 = vmatpush1.bf16.msra.mxu0 0
  %156 = vmatprep.subr.bf16.mxu0 0
  %157 = vmatpush1.bf16.msra.mxu0 0
  %158 = vmatprep.subr.bf16.mxu0 0
  %159 = vmatpush1.bf16.msra.mxu0 0
  %160 = vmatprep.subr.bf16.mxu0 0
  %161 = vmatpush1.bf16.msra.mxu0 0
  %162 = vmatprep.subr.bf16.mxu0 0
  %163 = vmatpush1.bf16.msra.mxu0 0
  %164 = vmatprep.subr.bf16.mxu0 0
  %165 = vmatpush1.bf16.msra.mxu0 0
  %166 = vmatprep.subr.bf16.mxu0 0
  %167 = vmatpush1.bf16.msra.mxu0 0
  %168 = vmatprep.subr.bf16.mxu0 0
  %169 = vmatpush1.bf16.msra.mxu0 0
  %170 = vmatprep.subr.bf16.mxu0 0
  %171 = vmatpush1.bf16.msra.mxu0 0
  %172 = vmatprep.mubr.bf16.mxu0 0
  %173 = vmatmul.mubr.bf16.gmra.mrb[0].mxu0 %v138
  %v174 = vpop.f32.mrb[0].mxu0
  %v175 = vadd.f32 %v49, %v174
  %v176 = vpop.f32.mrb[0].mxu0
  %v177 = vadd.f32 %v53, %v176
  %v178 = vpop.f32.mrb[0].mxu0
  %v179 = vpop.f32.mrb[0].mxu0
  %180 = vdwg.mxu0
  %181 = vmatprep.subr.bf16.mxu0 %v115
  %182 = vmatpush1.bf16.msra.mxu0 %v114
  %183 = vmatprep.subr.bf16.mxu0 %v121
  %184 = vmatpush1.bf16.msra.mxu0 %v120
  %185 = vmatprep.subr.bf16.mxu0 0
  %186 = vmatpush1.bf16.msra.mxu0 0
  %187 = vmatprep.subr.bf16.mxu0 0
  %188 = vmatpush1.bf16.msra.mxu0 0
  %189 = vmatprep.subr.bf16.mxu0 0
  %190 = vmatpush1.bf16.msra.mxu0 0
  %191 = vmatprep.subr.bf16.mxu0 0
  %192 = vmatpush1.bf16.msra.mxu0 0
  %193 = vmatprep.subr.bf16.mxu0 0
  %194 = vmatpush1.bf16.msra.mxu0 0
  %195 = vmatprep.subr.bf16.mxu0 0
  %196 = vmatpush1.bf16.msra.mxu0 0
  %197 = vmatprep.subr.bf16.mxu0 0
  %198 = vmatpush1.bf16.msra.mxu0 0
  %199 = vmatprep.subr.bf16.mxu0 0
  %200 = vmatpush1.bf16.msra.mxu0 0
  %201 = vmatprep.subr.bf16.mxu0 0
  %202 = vmatpush1.bf16.msra.mxu0 0
  %203 = vmatprep.subr.bf16.mxu0 0
  %204 = vmatpush1.bf16.msra.mxu0 0
  %205 = vmatprep.subr.bf16.mxu0 0
  %206 = vmatpush1.bf16.msra.mxu0 0
  %207 = vmatprep.subr.bf16.mxu0 0
  %208 = vmatpush1.bf16.msra.mxu0 0
  %209 = vmatprep.subr.bf16.mxu0 0
  %210 = vmatpush1.bf16.msra.mxu0 0
  %211 = vmatprep.subr.bf16.mxu0 0
  %212 = vmatpush1.bf16.msra.mxu0 0
  %213 = vmatprep.mubr.bf16.mxu0 0
  %214 = vmatmul.mubr.bf16.gmra.mrb[0].mxu0 %v138
  %v215 = vpop.f32.mrb[0].mxu0
  %v216 = vadd.f32 %v57, %v215
  %v217 = vpop.f32.mrb[0].mxu0
  %v218 = vadd.f32 %v61, %v217
  %v219 = vpop.f32.mrb[0].mxu0
  %v220 = vpop.f32.mrb[0].mxu0
  %221 = vdwg.mxu0
  %222 = vmatprep.subr.bf16.mxu0 %v117
  %223 = vmatpush1.bf16.msra.mxu0 %v116
  %224 = vmatprep.subr.bf16.mxu0 %v123
  %225 = vmatpush1.bf16.msra.mxu0 %v122
  %226 = vmatprep.subr.bf16.mxu0 0
  %227 = vmatpush1.bf16.msra.mxu0 0
  %228 = vmatprep.subr.bf16.mxu0 0
  %229 = vmatpush1.bf16.msra.mxu0 0
  %230 = vmatprep.subr.bf16.mxu0 0
  %231 = vmatpush1.bf16.msra.mxu0 0
  %232 = vmatprep.subr.bf16.mxu0 0
  %233 = vmatpush1.bf16.msra.mxu0 0
  %234 = vmatprep.subr.bf16.mxu0 0
  %235 = vmatpush1.bf16.msra.mxu0 0
  %236 = vmatprep.subr.bf16.mxu0 0
  %237 = vmatpush1.bf16.msra.mxu0 0
  %238 = vmatprep.subr.bf16.mxu0 0
  %239 = vmatpush1.bf16.msra.mxu0 0
  %240 = vmatprep.subr.bf16.mxu0 0
  %241 = vmatpush1.bf16.msra.mxu0 0
  %242 = vmatprep.subr.bf16.mxu0 0
  %243 = vmatpush1.bf16.msra.mxu0 0
  %244 = vmatprep.subr.bf16.mxu0 0
  %245 = vmatpush1.bf16.msra.mxu0 0
  %246 = vmatprep.subr.bf16.mxu0 0
  %247 = vmatpush1.bf16.msra.mxu0 0
  %248 = vmatprep.subr.bf16.mxu0 0
  %249 = vmatpush1.bf16.msra.mxu0 0
  %250 = vmatprep.subr.bf16.mxu0 0
  %251 = vmatpush1.bf16.msra.mxu0 0
  %252 = vmatprep.subr.bf16.mxu0 0
  %253 = vmatpush1.bf16.msra.mxu0 0
  %254 = vmatprep.mubr.bf16.mxu0 0
  %255 = vmatmul.mubr.bf16.gmra.mrb[0].mxu0 %v138
  %v256 = vpop.f32.mrb[0].mxu0
  %v257 = vadd.f32 %v65, %v256
  %v258 = vpop.f32.mrb[0].mxu0
  %v259 = vadd.f32 %v69, %v258
  %v260 = vpop.f32.mrb[0].mxu0
  %v261 = vpop.f32.mrb[0].mxu0
  %262 = vdwg.mxu0
  %v263 = vmul.f32 %v257, 0.5
  %v264 = vmul.f32 %v259, 0.5
  %v265 = vmul.f32 %v257, 0.70710677
  %v266 = vmul.f32 %v259, 0.70710677
  %v267 = verf.f32.pop %v265
  %v268 = verf.f32.pop %v266
  %v269 = vadd.f32 %v267, 1.0
  %v270 = vadd.f32 %v268, 1.0
  %v271 = vmul.f32 %v263, %v269
  %v272 = vmul.f32 %v264, %v270
  %v273 = vpack.c.bf16 %v271, %v271
  %v274 = vpack.c.bf16 %v272, %v272
  %v275 = vld [vmem:[%s6] sm:$0xf]
  %v276 = vld [vmem:[%s6 + $0x4] sm:$0xf]
  %v277 = vld [vmem:[%s6 + $0x8] sm:$0xf]
  %v278 = vld [vmem:[%s6 + $0xc] sm:$0xf]
  %v279 = vld [vmem:[%s6 + $0x10] sm:$0xf]
  %v280 = vld [vmem:[%s6 + $0x14] sm:$0xf]
  %v281 = vld [vmem:[%s6 + $0x18] sm:$0xf]
  %v282 = vld [vmem:[%s6 + $0x1c] sm:$0xf]
  %v283 = vld [vmem:[%s6 + $0x20] sm:$0xf]
  %v284 = vld [vmem:[%s6 + $0x24] sm:$0xf]
  %v285 = vld [vmem:[%s6 + $0x28] sm:$0xf]
  %v286 = vld [vmem:[%s6 + $0x2c] sm:$0xf]
  %v287 = vld [vmem:[%s6 + $0x30] sm:$0xf]
  %v288 = vld [vmem:[%s6 + $0x34] sm:$0xf]
  %v289 = vld [vmem:[%s6 + $0x38] sm:$0xf]
  %v290 = vld [vmem:[%s6 + $0x3c] sm:$0xf]
  %v291 = vld [vmem:[%s6 + $0x40] sm:$0xf]
  %v292 = vld [vmem:[%s6 + $0x44] sm:$0xf]
  %v293 = vld [vmem:[%s6 + $0x48] sm:$0xf]
  %v294 = vld [vmem:[%s6 + $0x4c] sm:$0xf]
  %v295 = vld [vmem:[%s6 + $0x50] sm:$0xf]
  %v296 = vld [vmem:[%s6 + $0x54] sm:$0xf]
  %v297 = vld [vmem:[%s6 + $0x58] sm:$0xf]
  %v298 = vld [vmem:[%s6 + $0x5c] sm:$0xf]
  %v299 = vld [vmem:[%s6 + $0x60] sm:$0xf]
  %v300 = vld [vmem:[%s6 + $0x64] sm:$0xf]
  %v301 = vld [vmem:[%s6 + $0x68] sm:$0xf]
  %v302 = vld [vmem:[%s6 + $0x6c] sm:$0xf]
  %v303 = vld [vmem:[%s6 + $0x70] sm:$0xf]
  %v304 = vld [vmem:[%s6 + $0x74] sm:$0xf]
  %v305 = vld [vmem:[%s6 + $0x78] sm:$0xf]
  %v306 = vld [vmem:[%s6 + $0x7c] sm:$0xf]
  %v339 = vunpack.c.l.b16 %v275
  %v340 = vunpack.c.l.b16 %v276
  %v341 = vunpack.c.l.b16 %v277
  %v342 = vunpack.c.l.b16 %v278
  %v343 = vunpack.c.l.b16 %v279
  %v344 = vunpack.c.l.b16 %v280
  %v345 = vunpack.c.l.b16 %v281
  %v346 = vunpack.c.l.b16 %v282
  %v347 = vunpack.c.l.b16 %v283
  %v348 = vunpack.c.l.b16 %v284
  %v349 = vunpack.c.l.b16 %v285
  %v350 = vunpack.c.l.b16 %v286
  %v351 = vunpack.c.l.b16 %v287
  %v352 = vunpack.c.l.b16 %v288
  %v353 = vunpack.c.l.b16 %v289
  %v354 = vunpack.c.l.b16 %v290
  %v355 = vunpack.c.l.b16 %v291
  %v356 = vunpack.c.l.b16 %v292
  %v357 = vunpack.c.l.b16 %v293
  %v358 = vunpack.c.l.b16 %v294
  %v359 = vunpack.c.l.b16 %v295
  %v360 = vunpack.c.l.b16 %v296
  %v361 = vunpack.c.l.b16 %v297
  %v362 = vunpack.c.l.b16 %v298
  %v363 = vunpack.c.l.b16 %v299
  %v364 = vunpack.c.l.b16 %v300
  %v365 = vunpack.c.l.b16 %v301
  %v366 = vunpack.c.l.b16 %v302
  %v367 = vunpack.c.l.b16 %v303
  %v368 = vunpack.c.l.b16 %v304
  %v369 = vunpack.c.l.b16 %v305
  %v370 = vunpack.c.l.b16 %v306
  %v371 = vpack.c.b16 %v340, %v339
  %v372 = vpack.c.b16 %v342, %v341
  %v373 = vpack.c.b16 %v344, %v343
  %v374 = vpack.c.b16 %v346, %v345
  %v375 = vpack.c.b16 %v348, %v347
  %v376 = vpack.c.b16 %v350, %v349
  %v377 = vpack.c.b16 %v352, %v351
  %v378 = vpack.c.b16 %v354, %v353
  %v379 = vpack.c.b16 %v356, %v355
  %v380 = vpack.c.b16 %v358, %v357
  %v381 = vpack.c.b16 %v360, %v359
  %v382 = vpack.c.b16 %v362, %v361
  %v383 = vpack.c.b16 %v364, %v363
  %v384 = vpack.c.b16 %v366, %v365
  %v385 = vpack.c.b16 %v368, %v367
  %v386 = vpack.c.b16 %v370, %v369
  %403 = vmatprep.subr.bf16.mxu0 0
  %404 = vmatpush1.bf16.msra.mxu0 %v371
  %405 = vmatprep.subr.bf16.mxu0 0
  %406 = vmatpush1.bf16.msra.mxu0 %v372
  %407 = vmatprep.subr.bf16.mxu0 0
  %408 = vmatpush1.bf16.msra.mxu0 %v373
  %409 = vmatprep.subr.bf16.mxu0 0
  %410 = vmatpush1.bf16.msra.mxu0 %v374
  %411 = vmatprep.subr.bf16.mxu0 0
  %412 = vmatpush1.bf16.msra.mxu0 %v375
  %413 = vmatprep.subr.bf16.mxu0 0
  %414 = vmatpush1.bf16.msra.mxu0 %v376
  %415 = vmatprep.subr.bf16.mxu0 0
  %416 = vmatpush1.bf16.msra.mxu0 %v377
  %417 = vmatprep.subr.bf16.mxu0 0
  %418 = vmatpush1.bf16.msra.mxu0 %v378
  %419 = vmatprep.subr.bf16.mxu0 0
  %420 = vmatpush1.bf16.msra.mxu0 %v379
  %421 = vmatprep.subr.bf16.mxu0 0
  %422 = vmatpush1.bf16.msra.mxu0 %v380
  %423 = vmatprep.subr.bf16.mxu0 0
  %424 = vmatpush1.bf16.msra.mxu0 %v381
  %425 = vmatprep.subr.bf16.mxu0 0
  %426 = vmatpush1.bf16.msra.mxu0 %v382
  %427 = vmatprep.subr.bf16.mxu0 0
  %428 = vmatpush1.bf16.msra.mxu0 %v383
  %429 = vmatprep.subr.bf16.mxu0 0
  %430 = vmatpush1.bf16.msra.mxu0 %v384
  %431 = vmatprep.subr.bf16.mxu0 0
  %432 = vmatpush1.bf16.msra.mxu0 %v385
  %433 = vmatprep.subr.bf16.mxu0 0
  %434 = vmatpush1.bf16.msra.mxu0 %v386
  %435 = vmatprep.mubr.bf16.mxu0 %v274
  %436 = vmatmul.mubr.bf16.gmra.mrb[0].mxu0 %v273
  %v437 = vpop.f32.mrb[0].mxu0
  %v438 = vadd.f32 0.0, %v437
  %v439 = vpop.f32.mrb[0].mxu0
  %v440 = vpop.f32.mrb[0].mxu0
  %v441 = vpop.f32.mrb[0].mxu0
  %442 = vdwg.mxu0
  %v443 = vmul.f32 %v175, 0.5
  %v444 = vmul.f32 %v177, 0.5
  %v445 = vmul.f32 %v216, 0.5
  %v446 = vmul.f32 %v218, 0.5
  %v447 = vmul.f32 %v175, 0.70710677
  %v448 = vmul.f32 %v177, 0.70710677
  %v449 = vmul.f32 %v216, 0.70710677
  %v450 = vmul.f32 %v218, 0.70710677
  %v451 = verf.f32.pop %v447
  %v452 = verf.f32.pop %v448
  %v453 = verf.f32.pop %v449
  %v454 = verf.f32.pop %v450
  %v455 = vadd.f32 %v451, 1.0
  %v456 = vadd.f32 %v452, 1.0
  %v457 = vadd.f32 %v453, 1.0
  %v458 = vadd.f32 %v454, 1.0
  %v459 = vmul.f32 %v443, %v455
  %v460 = vmul.f32 %v444, %v456
  %v461 = vmul.f32 %v445, %v457
  %v462 = vmul.f32 %v446, %v458
  %v463 = vpack.c.bf16 %v459, %v459
  %v464 = vpack.c.bf16 %v460, %v460
  %v465 = vpack.c.bf16 %v461, %v461
  %v466 = vpack.c.bf16 %v462, %v462
  %v467 = vld [vmem:[%s3] sm:$0xff]
  %v468 = vld [vmem:[%s3 + $0x8] sm:$0xff]
  %v469 = vld [vmem:[%s3 + $0x10] sm:$0xff]
  %v470 = vld [vmem:[%s3 + $0x18] sm:$0xff]
  %v471 = vld [vmem:[%s3 + $0x20] sm:$0xff]
  %v472 = vld [vmem:[%s3 + $0x28] sm:$0xff]
  %v473 = vld [vmem:[%s3 + $0x30] sm:$0xff]
  %v474 = vld [vmem:[%s3 + $0x38] sm:$0xff]
  %v475 = vld [vmem:[%s3 + $0x40] sm:$0xff]
  %v476 = vld [vmem:[%s3 + $0x48] sm:$0xff]
  %v477 = vld [vmem:[%s3 + $0x50] sm:$0xff]
  %v478 = vld [vmem:[%s3 + $0x58] sm:$0xff]
  %v479 = vld [vmem:[%s3 + $0x60] sm:$0xff]
  %v480 = vld [vmem:[%s3 + $0x68] sm:$0xff]
  %v481 = vld [vmem:[%s3 + $0x70] sm:$0xff]
  %v482 = vld [vmem:[%s3 + $0x78] sm:$0xff]
  %v483 = vld [vmem:[%s3 + $0x80] sm:$0xff]
  %v484 = vld [vmem:[%s3 + $0x88] sm:$0xff]
  %v485 = vld [vmem:[%s3 + $0x90] sm:$0xff]
  %v486 = vld [vmem:[%s3 + $0x98] sm:$0xff]
  %v487 = vld [vmem:[%s3 + $0xa0] sm:$0xff]
  %v488 = vld [vmem:[%s3 + $0xa8] sm:$0xff]
  %v489 = vld [vmem:[%s3 + $0xb0] sm:$0xff]
  %v490 = vld [vmem:[%s3 + $0xb8] sm:$0xff]
  %v491 = vld [vmem:[%s3 + $0xc0] sm:$0xff]
  %v492 = vld [vmem:[%s3 + $0xc8] sm:$0xff]
  %v493 = vld [vmem:[%s3 + $0xd0] sm:$0xff]
  %v494 = vld [vmem:[%s3 + $0xd8] sm:$0xff]
  %v495 = vld [vmem:[%s3 + $0xe0] sm:$0xff]
  %v496 = vld [vmem:[%s3 + $0xe8] sm:$0xff]
  %v497 = vld [vmem:[%s3 + $0xf0] sm:$0xff]
  %v498 = vld [vmem:[%s3 + $0xf8] sm:$0xff]
  %v499 = vld [vmem:[%s3 + $0x100] sm:$0xff]
  %v500 = vld [vmem:[%s3 + $0x108] sm:$0xff]
  %v501 = vld [vmem:[%s3 + $0x110] sm:$0xff]
  %v502 = vld [vmem:[%s3 + $0x118] sm:$0xff]
  %v503 = vld [vmem:[%s3 + $0x120] sm:$0xff]
  %v504 = vld [vmem:[%s3 + $0x128] sm:$0xff]
  %v505 = vld [vmem:[%s3 + $0x130] sm:$0xff]
  %v506 = vld [vmem:[%s3 + $0x138] sm:$0xff]
  %v507 = vld [vmem:[%s3 + $0x140] sm:$0xff]
  %v508 = vld [vmem:[%s3 + $0x148] sm:$0xff]
  %v509 = vld [vmem:[%s3 + $0x150] sm:$0xff]
  %v510 = vld [vmem:[%s3 + $0x158] sm:$0xff]
  %v511 = vld [vmem:[%s3 + $0x160] sm:$0xff]
  %v512 = vld [vmem:[%s3 + $0x168] sm:$0xff]
  %v513 = vld [vmem:[%s3 + $0x170] sm:$0xff]
  %v514 = vld [vmem:[%s3 + $0x178] sm:$0xff]
  %v515 = vld [vmem:[%s3 + $0x180] sm:$0xff]
  %v516 = vld [vmem:[%s3 + $0x188] sm:$0xff]
  %v517 = vld [vmem:[%s3 + $0x190] sm:$0xff]
  %v518 = vld [vmem:[%s3 + $0x198] sm:$0xff]
  %v519 = vld [vmem:[%s3 + $0x1a0] sm:$0xff]
  %v520 = vld [vmem:[%s3 + $0x1a8] sm:$0xff]
  %v521 = vld [vmem:[%s3 + $0x1b0] sm:$0xff]
  %v522 = vld [vmem:[%s3 + $0x1b8] sm:$0xff]
  %v523 = vld [vmem:[%s3 + $0x1c0] sm:$0xff]
  %v524 = vld [vmem:[%s3 + $0x1c8] sm:$0xff]
  %v525 = vld [vmem:[%s3 + $0x1d0] sm:$0xff]
  %v526 = vld [vmem:[%s3 + $0x1d8] sm:$0xff]
  %v527 = vld [vmem:[%s3 + $0x1e0] sm:$0xff]
  %v528 = vld [vmem:[%s3 + $0x1e8] sm:$0xff]
  %v529 = vld [vmem:[%s3 + $0x1f0] sm:$0xff]
  %v530 = vld [vmem:[%s3 + $0x1f8] sm:$0xff]
  %v531 = vld [vmem:[%s4] sm:$0x3]
  %v533 = vlaneseq
  %v534 = vshrl.u32 %v533, 7
  %v535 = vsub.s32 0, %v534
  %v536 = vrot.slane %v531, %v535
  %v537 = vlaneseq
  %v538 = vshrl.u32 %v537, 7
  %v539 = vsub.s32 1, %v538
  %v540 = vrot.slane %v531, %v539
  %v607 = vunpack.c.l.b16 %v467
  %v608 = vunpack.c.h.b16 %v467
  %v609 = vunpack.c.l.b16 %v468
  %v610 = vunpack.c.h.b16 %v468
  %v611 = vunpack.c.l.b16 %v469
  %v612 = vunpack.c.h.b16 %v469
  %v613 = vunpack.c.l.b16 %v470
  %v614 = vunpack.c.h.b16 %v470
  %v615 = vunpack.c.l.b16 %v471
  %v616 = vunpack.c.h.b16 %v471
  %v617 = vunpack.c.l.b16 %v472
  %v618 = vunpack.c.h.b16 %v472
  %v619 = vunpack.c.l.b16 %v473
  %v620 = vunpack.c.h.b16 %v473
  %v621 = vunpack.c.l.b16 %v474
  %v622 = vunpack.c.h.b16 %v474
  %v623 = vunpack.c.l.b16 %v475
  %v624 = vunpack.c.h.b16 %v475
  %v625 = vunpack.c.l.b16 %v476
  %v626 = vunpack.c.h.b16 %v476
  %v627 = vunpack.c.l.b16 %v477
  %v628 = vunpack.c.h.b16 %v477
  %v629 = vunpack.c.l.b16 %v478
  %v630 = vunpack.c.h.b16 %v478
  %v631 = vunpack.c.l.b16 %v479
  %v632 = vunpack.c.h.b16 %v479
  %v633 = vunpack.c.l.b16 %v480
  %v634 = vunpack.c.h.b16 %v480
  %v635 = vunpack.c.l.b16 %v481
  %v636 = vunpack.c.h.b16 %v481
  %v637 = vunpack.c.l.b16 %v482
  %v638 = vunpack.c.h.b16 %v482
  %v639 = vunpack.c.l.b16 %v483
  %v640 = vunpack.c.h.b16 %v483
  %v641 = vunpack.c.l.b16 %v484
  %v642 = vunpack.c.h.b16 %v484
  %v643 = vunpack.c.l.b16 %v485
  %v644 = vunpack.c.h.b16 %v485
  %v645 = vunpack.c.l.b16 %v486
  %v646 = vunpack.c.h.b16 %v486
  %v647 = vunpack.c.l.b16 %v487
  %v648 = vunpack.c.h.b16 %v487
  %v649 = vunpack.c.l.b16 %v488
  %v650 = vunpack.c.h.b16 %v488
  %v651 = vunpack.c.l.b16 %v489
  %v652 = vunpack.c.h.b16 %v489
  %v653 = vunpack.c.l.b16 %v490
  %v654 = vunpack.c.h.b16 %v490
  %v655 = vunpack.c.l.b16 %v491
  %v656 = vunpack.c.h.b16 %v491
  %v657 = vunpack.c.l.b16 %v492
  %v658 = vunpack.c.h.b16 %v492
  %v659 = vunpack.c.l.b16 %v493
  %v660 = vunpack.c.h.b16 %v493
  %v661 = vunpack.c.l.b16 %v494
  %v662 = vunpack.c.h.b16 %v494
  %v663 = vunpack.c.l.b16 %v495
  %v664 = vunpack.c.h.b16 %v495
  %v665 = vunpack.c.l.b16 %v496
  %v666 = vunpack.c.h.b16 %v496
  %v667 = vunpack.c.l.b16 %v497
  %v668 = vunpack.c.h.b16 %v497
  %v669 = vunpack.c.l.b16 %v498
  %v670 = vunpack.c.h.b16 %v498
  %v671 = vunpack.c.l.b16 %v499
  %v672 = vunpack.c.h.b16 %v499
  %v673 = vunpack.c.l.b16 %v500
  %v674 = vunpack.c.h.b16 %v500
  %v675 = vunpack.c.l.b16 %v501
  %v676 = vunpack.c.h.b16 %v501
  %v677 = vunpack.c.l.b16 %v502
  %v678 = vunpack.c.h.b16 %v502
  %v679 = vunpack.c.l.b16 %v503
  %v680 = vunpack.c.h.b16 %v503
  %v681 = vunpack.c.l.b16 %v504
  %v682 = vunpack.c.h.b16 %v504
  %v683 = vunpack.c.l.b16 %v505
  %v684 = vunpack.c.h.b16 %v505
  %v685 = vunpack.c.l.b16 %v506
  %v686 = vunpack.c.h.b16 %v506
  %v687 = vunpack.c.l.b16 %v507
  %v688 = vunpack.c.h.b16 %v507
  %v689 = vunpack.c.l.b16 %v508
  %v690 = vunpack.c.h.b16 %v508
  %v691 = vunpack.c.l.b16 %v509
  %v692 = vunpack.c.h.b16 %v509
  %v693 = vunpack.c.l.b16 %v510
  %v694 = vunpack.c.h.b16 %v510
  %v695 = vunpack.c.l.b16 %v511
  %v696 = vunpack.c.h.b16 %v511
  %v697 = vunpack.c.l.b16 %v512
  %v698 = vunpack.c.h.b16 %v512
  %v699 = vunpack.c.l.b16 %v513
  %v700 = vunpack.c.h.b16 %v513
  %v701 = vunpack.c.l.b16 %v514
  %v702 = vunpack.c.h.b16 %v514
  %v703 = vunpack.c.l.b16 %v515
  %v704 = vunpack.c.h.b16 %v515
  %v705 = vunpack.c.l.b16 %v516
  %v706 = vunpack.c.h.b16 %v516
  %v707 = vunpack.c.l.b16 %v517
  %v708 = vunpack.c.h.b16 %v517
  %v709 = vunpack.c.l.b16 %v518
  %v710 = vunpack.c.h.b16 %v518
  %v711 = vunpack.c.l.b16 %v519
  %v712 = vunpack.c.h.b16 %v519
  %v713 = vunpack.c.l.b16 %v520
  %v714 = vunpack.c.h.b16 %v520
  %v715 = vunpack.c.l.b16 %v521
  %v716 = vunpack.c.h.b16 %v521
  %v717 = vunpack.c.l.b16 %v522
  %v718 = vunpack.c.h.b16 %v522
  %v719 = vunpack.c.l.b16 %v523
  %v720 = vunpack.c.h.b16 %v523
  %v721 = vunpack.c.l.b16 %v524
  %v722 = vunpack.c.h.b16 %v524
  %v723 = vunpack.c.l.b16 %v525
  %v724 = vunpack.c.h.b16 %v525
  %v725 = vunpack.c.l.b16 %v526
  %v726 = vunpack.c.h.b16 %v526
  %v727 = vunpack.c.l.b16 %v527
  %v728 = vunpack.c.h.b16 %v527
  %v729 = vunpack.c.l.b16 %v528
  %v730 = vunpack.c.h.b16 %v528
  %v731 = vunpack.c.l.b16 %v529
  %v732 = vunpack.c.h.b16 %v529
  %v733 = vunpack.c.l.b16 %v530
  %v734 = vunpack.c.h.b16 %v530
  %v735 = vpack.c.b16 %v609, %v607
  %v736 = vpack.c.b16 %v610, %v608
  %v737 = vpack.c.b16 %v613, %v611
  %v738 = vpack.c.b16 %v614, %v612
  %v739 = vpack.c.b16 %v617, %v615
  %v740 = vpack.c.b16 %v618, %v616
  %v741 = vpack.c.b16 %v621, %v619
  %v742 = vpack.c.b16 %v622, %v620
  %v743 = vpack.c.b16 %v625, %v623
  %v744 = vpack.c.b16 %v626, %v624
  %v745 = vpack.c.b16 %v629, %v627
  %v746 = vpack.c.b16 %v630, %v628
  %v747 = vpack.c.b16 %v633, %v631
  %v748 = vpack.c.b16 %v634, %v632
  %v749 = vpack.c.b16 %v637, %v635
  %v750 = vpack.c.b16 %v638, %v636
  %v751 = vpack.c.b16 %v641, %v639
  %v752 = vpack.c.b16 %v642, %v640
  %v753 = vpack.c.b16 %v645, %v643
  %v754 = vpack.c.b16 %v646, %v644
  %v755 = vpack.c.b16 %v649, %v647
  %v756 = vpack.c.b16 %v650, %v648
  %v757 = vpack.c.b16 %v653, %v651
  %v758 = vpack.c.b16 %v654, %v652
  %v759 = vpack.c.b16 %v657, %v655
  %v760 = vpack.c.b16 %v658, %v656
  %v761 = vpack.c.b16 %v661, %v659
  %v762 = vpack.c.b16 %v662, %v660
  %v763 = vpack.c.b16 %v665, %v663
  %v764 = vpack.c.b16 %v666, %v664
  %v765 = vpack.c.b16 %v669, %v667
  %v766 = vpack.c.b16 %v670, %v668
  %v767 = vpack.c.b16 %v673, %v671
  %v768 = vpack.c.b16 %v674, %v672
  %v769 = vpack.c.b16 %v677, %v675
  %v770 = vpack.c.b16 %v678, %v676
  %v771 = vpack.c.b16 %v681, %v679
  %v772 = vpack.c.b16 %v682, %v680
  %v773 = vpack.c.b16 %v685, %v683
  %v774 = vpack.c.b16 %v686, %v684
  %v775 = vpack.c.b16 %v689, %v687
  %v776 = vpack.c.b16 %v690, %v688
  %v777 = vpack.c.b16 %v693, %v691
  %v778 = vpack.c.b16 %v694, %v692
  %v779 = vpack.c.b16 %v697, %v695
  %v780 = vpack.c.b16 %v698, %v696
  %v781 = vpack.c.b16 %v701, %v699
  %v782 = vpack.c.b16 %v702, %v700
  %v783 = vpack.c.b16 %v705, %v703
  %v784 = vpack.c.b16 %v706, %v704
  %v785 = vpack.c.b16 %v709, %v707
  %v786 = vpack.c.b16 %v710, %v708
  %v787 = vpack.c.b16 %v713, %v711
  %v788 = vpack.c.b16 %v714, %v712
  %v789 = vpack.c.b16 %v717, %v715
  %v790 = vpack.c.b16 %v718, %v716
  %v791 = vpack.c.b16 %v721, %v719
  %v792 = vpack.c.b16 %v722, %v720
  %v793 = vpack.c.b16 %v725, %v723
  %v794 = vpack.c.b16 %v726, %v724
  %v795 = vpack.c.b16 %v729, %v727
  %v796 = vpack.c.b16 %v730, %v728
  %v797 = vpack.c.b16 %v733, %v731
  %v798 = vpack.c.b16 %v734, %v732
  %863 = vmatprep.subr.bf16.mxu0 %v736
  %864 = vmatpush1.bf16.msra.mxu0 %v735
  %865 = vmatprep.subr.bf16.mxu0 %v738
  %866 = vmatpush1.bf16.msra.mxu0 %v737
  %867 = vmatprep.subr.bf16.mxu0 %v740
  %868 = vmatpush1.bf16.msra.mxu0 %v739
  %869 = vmatprep.subr.bf16.mxu0 %v742
  %870 = vmatpush1.bf16.msra.mxu0 %v741
  %871 = vmatprep.subr.bf16.mxu0 %v744
  %872 = vmatpush1.bf16.msra.mxu0 %v743
  %873 = vmatprep.subr.bf16.mxu0 %v746
  %874 = vmatpush1.bf16.msra.mxu0 %v745
  %875 = vmatprep.subr.bf16.mxu0 %v748
  %876 = vmatpush1.bf16.msra.mxu0 %v747
  %877 = vmatprep.subr.bf16.mxu0 %v750
  %878 = vmatpush1.bf16.msra.mxu0 %v749
  %879 = vmatprep.subr.bf16.mxu0 %v752
  %880 = vmatpush1.bf16.msra.mxu0 %v751
  %881 = vmatprep.subr.bf16.mxu0 %v754
  %882 = vmatpush1.bf16.msra.mxu0 %v753
  %883 = vmatprep.subr.bf16.mxu0 %v756
  %884 = vmatpush1.bf16.msra.mxu0 %v755
  %885 = vmatprep.subr.bf16.mxu0 %v758
  %886 = vmatpush1.bf16.msra.mxu0 %v757
  %887 = vmatprep.subr.bf16.mxu0 %v760
  %888 = vmatpush1.bf16.msra.mxu0 %v759
  %889 = vmatprep.subr.bf16.mxu0 %v762
  %890 = vmatpush1.bf16.msra.mxu0 %v761
  %891 = vmatprep.subr.bf16.mxu0 %v764
  %892 = vmatpush1.bf16.msra.mxu0 %v763
  %893 = vmatprep.subr.bf16.mxu0 %v766
  %894 = vmatpush1.bf16.msra.mxu0 %v765
  %895 = vmatprep.mubr.bf16.mxu0 %v464
  %896 = vmatmul.mubr.bf16.gmra.mrb[0].mxu0 %v463
  %v897 = vpop.f32.mrb[0].mxu0
  %v898 = vadd.f32 %v536, %v897
  %v899 = vpop.f32.mrb[0].mxu0
  %v900 = vadd.f32 %v540, %v899
  %v901 = vpop.f32.mrb[0].mxu0
  %v902 = vpop.f32.mrb[0].mxu0
  %903 = vdwg.mxu0
  %904 = vmatprep.subr.bf16.mxu0 %v768
  %905 = vmatpush1.bf16.msra.mxu0 %v767
  %906 = vmatprep.subr.bf16.mxu0 %v770
  %907 = vmatpush1.bf16.msra.mxu0 %v769
  %908 = vmatprep.subr.bf16.mxu0 %v772
  %909 = vmatpush1.bf16.msra.mxu0 %v771
  %910 = vmatprep.subr.bf16.mxu0 %v774
  %911 = vmatpush1.bf16.msra.mxu0 %v773
  %912 = vmatprep.subr.bf16.mxu0 %v776
  %913 = vmatpush1.bf16.msra.mxu0 %v775
  %914 = vmatprep.subr.bf16.mxu0 %v778
  %915 = vmatpush1.bf16.msra.mxu0 %v777
  %916 = vmatprep.subr.bf16.mxu0 %v780
  %917 = vmatpush1.bf16.msra.mxu0 %v779
  %918 = vmatprep.subr.bf16.mxu0 %v782
  %919 = vmatpush1.bf16.msra.mxu0 %v781
  %920 = vmatprep.subr.bf16.mxu0 %v784
  %921 = vmatpush1.bf16.msra.mxu0 %v783
  %922 = vmatprep.subr.bf16.mxu0 %v786
  %923 = vmatpush1.bf16.msra.mxu0 %v785
  %924 = vmatprep.subr.bf16.mxu0 %v788
  %925 = vmatpush1.bf16.msra.mxu0 %v787
  %926 = vmatprep.subr.bf16.mxu0 %v790
  %927 = vmatpush1.bf16.msra.mxu0 %v789
  %928 = vmatprep.subr.bf16.mxu0 %v792
  %929 = vmatpush1.bf16.msra.mxu0 %v791
  %930 = vmatprep.subr.bf16.mxu0 %v794
  %931 = vmatpush1.bf16.msra.mxu0 %v793
  %932 = vmatprep.subr.bf16.mxu0 %v796
  %933 = vmatpush1.bf16.msra.mxu0 %v795
  %934 = vmatprep.subr.bf16.mxu0 %v798
  %935 = vmatpush1.bf16.msra.mxu0 %v797
  %936 = vmatprep.mubr.bf16.mxu0 %v466
  %937 = vmatmul.mubr.bf16.gmra.mrb[0].mxu0 %v465
  %v938 = vpop.f32.mrb[0].mxu0
  %v939 = vadd.f32 %v898, %v938
  %v940 = vpop.f32.mrb[0].mxu0
  %v941 = vadd.f32 %v900, %v940
  %v942 = vpop.f32.mrb[0].mxu0
  %v943 = vpop.f32.mrb[0].mxu0
  %944 = vdwg.mxu0
  %v945 = vmul.f32 %v939, 0.5
  %v946 = vmul.f32 %v941, 0.5
  %v947 = vmul.f32 %v939, 0.70710677
  %v948 = vmul.f32 %v941, 0.70710677
  %v949 = verf.f32.pop %v947
  %v950 = verf.f32.pop %v948
  %v951 = vadd.f32 %v949, 1.0
  %v952 = vadd.f32 %v950, 1.0
  %v953 = vmul.f32 %v945, %v951
  %v954 = vmul.f32 %v946, %v952
  %v955 = vpack.c.bf16 %v953, %v953
  %v956 = vpack.c.bf16 %v954, %v954
  %v957 = vld [vmem:[%s5] sm:$0xf]
  %v958 = vld [vmem:[%s5 + $0x4] sm:$0xf]
  %v959 = vld [vmem:[%s5 + $0x8] sm:$0xf]
  %v960 = vld [vmem:[%s5 + $0xc] sm:$0xf]
  %v961 = vld [vmem:[%s5 + $0x10] sm:$0xf]
  %v962 = vld [vmem:[%s5 + $0x14] sm:$0xf]
  %v963 = vld [vmem:[%s5 + $0x18] sm:$0xf]
  %v964 = vld [vmem:[%s5 + $0x1c] sm:$0xf]
  %v965 = vld [vmem:[%s5 + $0x20] sm:$0xf]
  %v966 = vld [vmem:[%s5 + $0x24] sm:$0xf]
  %v967 = vld [vmem:[%s5 + $0x28] sm:$0xf]
  %v968 = vld [vmem:[%s5 + $0x2c] sm:$0xf]
  %v969 = vld [vmem:[%s5 + $0x30] sm:$0xf]
  %v970 = vld [vmem:[%s5 + $0x34] sm:$0xf]
  %v971 = vld [vmem:[%s5 + $0x38] sm:$0xf]
  %v972 = vld [vmem:[%s5 + $0x3c] sm:$0xf]
  %v973 = vld [vmem:[%s5 + $0x40] sm:$0xf]
  %v974 = vld [vmem:[%s5 + $0x44] sm:$0xf]
  %v975 = vld [vmem:[%s5 + $0x48] sm:$0xf]
  %v976 = vld [vmem:[%s5 + $0x4c] sm:$0xf]
  %v977 = vld [vmem:[%s5 + $0x50] sm:$0xf]
  %v978 = vld [vmem:[%s5 + $0x54] sm:$0xf]
  %v979 = vld [vmem:[%s5 + $0x58] sm:$0xf]
  %v980 = vld [vmem:[%s5 + $0x5c] sm:$0xf]
  %v981 = vld [vmem:[%s5 + $0x60] sm:$0xf]
  %v982 = vld [vmem:[%s5 + $0x64] sm:$0xf]
  %v983 = vld [vmem:[%s5 + $0x68] sm:$0xf]
  %v984 = vld [vmem:[%s5 + $0x6c] sm:$0xf]
  %v985 = vld [vmem:[%s5 + $0x70] sm:$0xf]
  %v986 = vld [vmem:[%s5 + $0x74] sm:$0xf]
  %v987 = vld [vmem:[%s5 + $0x78] sm:$0xf]
  %v988 = vld [vmem:[%s5 + $0x7c] sm:$0xf]
  %v1021 = vunpack.c.l.b16 %v957
  %v1022 = vunpack.c.l.b16 %v958
  %v1023 = vunpack.c.l.b16 %v959
  %v1024 = vunpack.c.l.b16 %v960
  %v1025 = vunpack.c.l.b16 %v961
  %v1026 = vunpack.c.l.b16 %v962
  %v1027 = vunpack.c.l.b16 %v963
  %v1028 = vunpack.c.l.b16 %v964
  %v1029 = vunpack.c.l.b16 %v965
  %v1030 = vunpack.c.l.b16 %v966
  %v1031 = vunpack.c.l.b16 %v967
  %v1032 = vunpack.c.l.b16 %v968
  %v1033 = vunpack.c.l.b16 %v969
  %v1034 = vunpack.c.l.b16 %v970
  %v1035 = vunpack.c.l.b16 %v971
  %v1036 = vunpack.c.l.b16 %v972
  %v1037 = vunpack.c.l.b16 %v973
  %v1038 = vunpack.c.l.b16 %v974
  %v1039 = vunpack.c.l.b16 %v975
  %v1040 = vunpack.c.l.b16 %v976
  %v1041 = vunpack.c.l.b16 %v977
  %v1042 = vunpack.c.l.b16 %v978
  %v1043 = vunpack.c.l.b16 %v979
  %v1044 = vunpack.c.l.b16 %v980
  %v1045 = vunpack.c.l.b16 %v981
  %v1046 = vunpack.c.l.b16 %v982
  %v1047 = vunpack.c.l.b16 %v983
  %v1048 = vunpack.c.l.b16 %v984
  %v1049 = vunpack.c.l.b16 %v985
  %v1050 = vunpack.c.l.b16 %v986
  %v1051 = vunpack.c.l.b16 %v987
  %v1052 = vunpack.c.l.b16 %v988
  %v1053 = vpack.c.b16 %v1022, %v1021
  %v1054 = vpack.c.b16 %v1024, %v1023
  %v1055 = vpack.c.b16 %v1026, %v1025
  %v1056 = vpack.c.b16 %v1028, %v1027
  %v1057 = vpack.c.b16 %v1030, %v1029
  %v1058 = vpack.c.b16 %v1032, %v1031
  %v1059 = vpack.c.b16 %v1034, %v1033
  %v1060 = vpack.c.b16 %v1036, %v1035
  %v1061 = vpack.c.b16 %v1038, %v1037
  %v1062 = vpack.c.b16 %v1040, %v1039
  %v1063 = vpack.c.b16 %v1042, %v1041
  %v1064 = vpack.c.b16 %v1044, %v1043
  %v1065 = vpack.c.b16 %v1046, %v1045
  %v1066 = vpack.c.b16 %v1048, %v1047
  %v1067 = vpack.c.b16 %v1050, %v1049
  %v1068 = vpack.c.b16 %v1052, %v1051
  %1085 = vmatprep.subr.bf16.mxu0 0
  %1086 = vmatpush1.bf16.msra.mxu0 %v1053
  %1087 = vmatprep.subr.bf16.mxu0 0
  %1088 = vmatpush1.bf16.msra.mxu0 %v1054
  %1089 = vmatprep.subr.bf16.mxu0 0
  %1090 = vmatpush1.bf16.msra.mxu0 %v1055
  %1091 = vmatprep.subr.bf16.mxu0 0
  %1092 = vmatpush1.bf16.msra.mxu0 %v1056
  %1093 = vmatprep.subr.bf16.mxu0 0
  %1094 = vmatpush1.bf16.msra.mxu0 %v1057
  %1095 = vmatprep.subr.bf16.mxu0 0
  %1096 = vmatpush1.bf16.msra.mxu0 %v1058
  %1097 = vmatprep.subr.bf16.mxu0 0
  %1098 = vmatpush1.bf16.msra.mxu0 %v1059
  %1099 = vmatprep.subr.bf16.mxu0 0
  %1100 = vmatpush1.bf16.msra.mxu0 %v1060
  %1101 = vmatprep.subr.bf16.mxu0 0
  %1102 = vmatpush1.bf16.msra.mxu0 %v1061
  %1103 = vmatprep.subr.bf16.mxu0 0
  %1104 = vmatpush1.bf16.msra.mxu0 %v1062
  %1105 = vmatprep.subr.bf16.mxu0 0
  %1106 = vmatpush1.bf16.msra.mxu0 %v1063
  %1107 = vmatprep.subr.bf16.mxu0 0
  %1108 = vmatpush1.bf16.msra.mxu0 %v1064
  %1109 = vmatprep.subr.bf16.mxu0 0
  %1110 = vmatpush1.bf16.msra.mxu0 %v1065
  %1111 = vmatprep.subr.bf16.mxu0 0
  %1112 = vmatpush1.bf16.msra.mxu0 %v1066
  %1113 = vmatprep.subr.bf16.mxu0 0
  %1114 = vmatpush1.bf16.msra.mxu0 %v1067
  %1115 = vmatprep.subr.bf16.mxu0 0
  %1116 = vmatpush1.bf16.msra.mxu0 %v1068
  %1117 = vmatprep.mubr.bf16.mxu0 %v956
  %1118 = vmatmul.mubr.bf16.gmra.mrb[0].mxu0 %v955
  %v1119 = vpop.f32.mrb[0].mxu0
  %v1120 = vadd.f32 %v438, %v1119
  %v1121 = vpop.f32.mrb[0].mxu0
  %v1122 = vpop.f32.mrb[0].mxu0
  %v1123 = vpop.f32.mrb[0].mxu0
  %1124 = vdwg.mxu0
  %v1125 = vld [vmem:[%s7] sm:$0x1]
  %v1127 = vlaneseq
  %v1128 = vshrl.u32 %v1127, 7
  %v1129 = vsub.s32 0, %v1128
  %v1130 = vrot.slane %v1125, %v1129
  %v1132 = vadd.f32 %v1120, %v1130
  %1133 = vst [vmem:[%s8] sm:$0xff] %v1132
  // Predicated region
  $region34: #{enhanced_grade_consistency_head.1} parent=0 // pred_check
    _
  $region35: #{enhanced_grade_consistency_head.1} parent=0 // pred_check_branch
    %1135 = sbr.rel (0) target = $region37
  $region36: #{enhanced_grade_consistency_head.1} parent=0 // pred_region
    _
  $region37: #{enhanced_grade_consistency_head.1} parent=0 // pred_fallthru
    _
  // Predicated region
  $region38: #{enhanced_grade_consistency_head.1} parent=0 // pred_check
    _
  $region39: #{enhanced_grade_consistency_head.1} parent=0 // pred_check_branch
    %1137 = sbr.rel (0) target = $region41
  $region40: #{enhanced_grade_consistency_head.1} parent=0 // pred_region
    _
  $region41: #{enhanced_grade_consistency_head.1} parent=0 // pred_fallthru
    _

</llo_original>
